<compile_context>
chip_gen: v7x
topology: tpu7x:2x2x1
jax: 0.10.0
libtpu: 0.0.40
codegen_flags: <defaults>
</compile_context>

<pallas_src>
import functools

import jax
import jax.numpy as jnp
from jax.experimental import pallas as pl
from jax.experimental.pallas import tpu as pltpu


# ---------------------------------------------------------------------------
# Kernels
# ---------------------------------------------------------------------------
def _categorical_single_k_kernel(x_ref, w_ref, b_ref, out_ref):
    """nk == 1 fast path: logits + softmax in a single pass, no scratch."""
    logits = jnp.dot(x_ref[...], w_ref[...], preferred_element_type=jnp.float32)
    logits = logits + b_ref[...]                       # (TB, L) + (1, L)
    m = jnp.max(logits, axis=-1, keepdims=True)        # numerically stable
    e = jnp.exp(logits - m)
    denom = jnp.sum(e, axis=-1, keepdims=True)
    out_ref[...] = (e / denom).astype(out_ref.dtype)   # exact divide


def _categorical_multi_k_kernel(x_ref, w_ref, b_ref, out_ref, acc_ref, *, tk):
    """K-tiled path: f32 accumulator in VMEM, softmax epilogue on last k step.

    The weight is fully resident in VMEM (constant index_map); we slice the
    current K chunk in-kernel instead of re-streaming it from HBM.
    """
    k = pl.program_id(1)

    @pl.when(k == 0)
    def _():
        acc_ref[...] = jnp.zeros_like(acc_ref)

    off = pl.multiple_of(k * tk, 128)                  # tk is a multiple of 128
    acc_ref[...] += jnp.dot(
        x_ref[...], w_ref[pl.ds(off, tk), :], preferred_element_type=jnp.float32
    )

    @pl.when(k == pl.num_programs(1) - 1)
    def _():
        logits = acc_ref[...] + b_ref[...]             # (TB, L) + (1, L)
        m = jnp.max(logits, axis=-1, keepdims=True)
        e = jnp.exp(logits - m)
        denom = jnp.sum(e, axis=-1, keepdims=True)
        out_ref[...] = (e / denom).astype(out_ref.dtype)


# ---------------------------------------------------------------------------
# Wrapper
# ---------------------------------------------------------------------------
def categorical_layer(x, weight, bias, *, max_batch_tile=None, max_k_tile=None,
                      use_bf16=True):
    """Pallas implementation of CategoricalLayer.forward.

    Args:
      x:      (B, input_dim) float32
      weight: (input_dim, label_dim) float32  (transposed vs. torch Linear)
      bias:   (label_dim,) float32
      max_batch_tile / max_k_tile: optional tile caps (generation-aware
        defaults derived from the VMEM budget when None).
      use_bf16: cast x / weight to bf16 for the MXU matmul (f32 accumulation).
    Returns:
      (probs,) where probs is (B, label_dim) float32.
    """
    B, D = x.shape
    Dw, L = weight.shape
    assert Dw == D, "weight must be (input_dim, label_dim)"

    # --- per-generation VMEM budget (v5e/v6e: 128 MiB, v7x: 64 MiB per TC).
    try:
        vmem_cap = int(pltpu.get_tpu_info().vmem_capacity_bytes)
    except Exception:
        vmem_cap = 64 << 20                       # conservative fallback
    vmem_budget = int(vmem_cap * 3 // 4)          # leave headroom

    small_vmem = vmem_cap <= (64 << 20)
    if max_batch_tile is None:
        max_batch_tile = 2048 if small_vmem else 4096
    if max_k_tile is None:
        max_k_tile = 2048 if small_vmem else 4096

    # --- dtypes: bf16 inputs to the MXU, f32 accumulation / softmax / output.
    in_dtype = jnp.bfloat16 if use_bf16 else x.dtype
    x_in = x.astype(in_dtype)
    w_in = weight.astype(in_dtype)
    bias2d = bias.reshape(1, L).astype(jnp.float32)

    # --- K tiling: full D if it fits; otherwise 128-aligned TK with zero-pad.
    if D <= max_k_tile:
        TK = D
        D_pad = D
    else:
        TK = max(128, (max_k_tile // 128) * 128)
        D_pad = pl.cdiv(D, TK) * TK
        if D_pad != D:
            pad = D_pad - D                        # zeros add nothing to the dot
            x_in = jnp.pad(x_in, ((0, 0), (0, pad)))
            w_in = jnp.pad(w_in, ((0, pad), (0, 0)))
    nk = D_pad // TK

    # --- batch tiling: multiples of 8, aim for >= 2 balanced tiles (megacore).
    if B <= 8:
        TB = B
    else:
        nb_target = max(2, pl.cdiv(B, max_batch_tile))
        if nb_target % 2:
            nb_target += 1
        TB = ((pl.cdiv(B, nb_target) + 7) // 8) * 8
        TB = min(TB, max(8, (max_batch_tile // 8) * 8))
    nb = pl.cdiv(B, TB)

    # --- VMEM estimate (lane padding: every L-wide buffer is physically >=128
    #     lanes; bias is sublane-padded to 8 rows).
    Lp = ((L + 127) // 128) * 128
    bytes_in = 2 if use_bf16 else 4
    est_bytes = (
        2 * TB * TK * bytes_in        # double-buffered x tile
        + 2 * D_pad * Lp * bytes_in   # resident weight (allow double buffer)
        + 2 * TB * Lp * 4             # double-buffered out tile (f32)
        + TB * Lp * 4                 # f32 accumulator scratch
        + 8 * Lp * 4                  # bias
    )
    vmem_limit = int(min(max(2 * est_bytes, 32 << 20), vmem_budget))

    out_shape = jax.ShapeDtypeStruct((B, L), jnp.float32)

    if nk == 1:
        grid_spec = pltpu.PrefetchScalarGridSpec(
            num_scalar_prefetch=0,
            grid=(nb,),
            in_specs=[
                pl.BlockSpec((TB, TK), lambda i: (i, 0)),       # x: batch tile
                pl.BlockSpec((D_pad, L), lambda i: (0, 0)),     # weight resident
                pl.BlockSpec((1, L), lambda i: (0, 0)),         # bias resident
            ],
            out_specs=pl.BlockSpec((TB, L), lambda i: (i, 0)),
        )
        kernel = _categorical_single_k_kernel
        dim_sem = ("parallel",)
    else:
        grid_spec = pltpu.PrefetchScalarGridSpec(
            num_scalar_prefetch=0,
            grid=(nb, nk),
            in_specs=[
                pl.BlockSpec((TB, TK), lambda i, k: (i, k)),    # x: new tile / step
                pl.BlockSpec((D_pad, L), lambda i, k: (0, 0)),  # weight resident
                pl.BlockSpec((1, L), lambda i, k: (0, 0)),      # bias resident
            ],
            out_specs=pl.BlockSpec((TB, L), lambda i, k: (i, 0)),
            scratch_shapes=[pltpu.VMEM((TB, L), jnp.float32)],
        )
        kernel = functools.partial(_categorical_multi_k_kernel, tk=TK)
        dim_sem = ("parallel", "arbitrary")

    probs = pl.pallas_call(
        kernel,
        out_shape=out_shape,
        grid_spec=grid_spec,
        compiler_params=pltpu.CompilerParams(
            dimension_semantics=dim_sem,
            vmem_limit_bytes=vmem_limit,
        ),
    )(x_in, w_in, bias2d)

    return (probs,)


# ---------------------------------------------------------------------------
# Reference + self-test
# ---------------------------------------------------------------------------
def _ref(x, weight, bias):
    return jax.nn.softmax(x @ weight + bias, axis=-1)


if __name__ == "__main__":
    key = jax.random.PRNGKey(0)

    # --- Case 1: shapes implied by the module (small): batch=8, in=32, labels=16
    B, input_dim, label_dim = 8, 32, 16
    kx, kw, kb, k2 = jax.random.split(key, 4)
    bound = 1.0 / (input_dim ** 0.5)
    weight = jax.random.uniform(kw, (input_dim, label_dim), jnp.float32,
                                minval=-bound, maxval=bound)
    bias = jax.random.uniform(kb, (label_dim,), jnp.float32,
                              minval=-bound, maxval=bound)
    x = jax.random.normal(kx, (B, input_dim), jnp.float32)

    (probs,) = categorical_layer(x, weight, bias)
    probs = jax.block_until_ready(probs)

    ref = _ref(x, weight, bias)
    assert probs.shape == (B, label_dim)
    # bf16 matmul inputs (f32 accumulation + exact f32 softmax) -> small delta
    # vs the full-f32 PyTorch reference; row sums are exact to f32 precision.
    assert jnp.allclose(probs, ref, atol=1e-2, rtol=1e-2)
    assert jnp.allclose(jnp.sum(probs, axis=-1), 1.0, atol=1e-5)

    # --- Case 2: exercise batch tiling (partial last tile) + K tiling.
    B2, D2, L2 = 40, 256, 16
    kx2, kw2, kb2, k3 = jax.random.split(k2, 4)
    bound2 = 1.0 / (D2 ** 0.5)
    w2 = jax.random.uniform(kw2, (D2, L2), jnp.float32, minval=-bound2, maxval=bound2)
    b2 = jax.random.uniform(kb2, (L2,), jnp.float32, minval=-bound2, maxval=bound2)
    x2 = jax.random.normal(kx2, (B2, D2), jnp.float32)

    (probs2,) = categorical_layer(x2, w2, b2, max_batch_tile=16, max_k_tile=128)
    probs2 = jax.block_until_ready(probs2)
    assert jnp.allclose(probs2, _ref(x2, w2, b2), atol=1e-2, rtol=1e-2)
    assert jnp.allclose(jnp.sum(probs2, axis=-1), 1.0, atol=1e-5)

    # --- Case 3: awkward D (> max_k_tile, not a multiple of 128) -> zero-pad path.
    B3, D3, L3 = 24, 200, 16
    kx3, kw3, kb3 = jax.random.split(k3, 3)
    bound3 = 1.0 / (D3 ** 0.5)
    w3 = jax.random.uniform(kw3, (D3, L3), jnp.float32, minval=-bound3, maxval=bound3)
    b3 = jax.random.uniform(kb3, (L3,), jnp.float32, minval=-bound3, maxval=bound3)
    x3 = jax.random.normal(kx3, (B3, D3), jnp.float32)

    (probs3,) = categorical_layer(x3, w3, b3, max_batch_tile=16, max_k_tile=128)
    probs3 = jax.block_until_ready(probs3)
    assert jnp.allclose(probs3, _ref(x3, w3, b3), atol=1e-2, rtol=1e-2)
    assert jnp.allclose(jnp.sum(probs3, axis=-1), 1.0, atol=1e-5)

    print("KERNEL_OK")
</pallas_src>

<mosaic_0001>
module attributes {stable_mosaic.version = 11 : i64} {
  func.func @_categorical_single_k_kernel(%arg0: i32, %arg1: memref<8x32xbf16, #tpu.memory_space<vmem>>, %arg2: memref<32x16xbf16, #tpu.memory_space<vmem>>, %arg3: memref<1x16xf32, #tpu.memory_space<vmem>>, %arg4: memref<8x16xf32, #tpu.memory_space<vmem>>) attributes {dimension_semantics = [#tpu.dimension_semantics<parallel>], iteration_bounds = array<i64: 1>, scalar_prefetch = 0 : i64, scratch_operands = 0 : i64, tpu.core_type = #tpu.core_type<tc>, window_params = [{transform_indices = @transform_0, window_bounds = array<i64: 8, 32>}, {pipeline_mode = #tpu.pipeline_mode<synchronous>, transform_indices = @transform_1, window_bounds = array<i64: 32, 16>}, {pipeline_mode = #tpu.pipeline_mode<synchronous>, transform_indices = @transform_2, window_bounds = array<i64: 1, 16>}, {transform_indices = @transform_3, window_bounds = array<i64: 8, 16>}]} {
    %c0 = arith.constant 0 : index
    %c0_0 = arith.constant 0 : index
    %0 = vector.load %arg1[%c0, %c0_0] : memref<8x32xbf16, #tpu.memory_space<vmem>>, vector<8x32xbf16>
    %c0_1 = arith.constant 0 : index
    %c0_2 = arith.constant 0 : index
    %1 = vector.load %arg2[%c0_1, %c0_2] : memref<32x16xbf16, #tpu.memory_space<vmem>>, vector<32x16xbf16>
    %cst = arith.constant dense<0.000000e+00> : vector<8x16xf32>
    %2 = tpu.matmul %0, %1, %cst {dimension_numbers = #tpu.dot_dimension_numbers<[1], [0], [0], [1], [0, 0, 1, 1], [], []>} : vector<8x32xbf16>, vector<32x16xbf16>, vector<8x16xf32> -> vector<8x16xf32>
    %c0_3 = arith.constant 0 : index
    %c0_4 = arith.constant 0 : index
    %3 = vector.load %arg3[%c0_3, %c0_4] : memref<1x16xf32, #tpu.memory_space<vmem>>, vector<1x16xf32>
    %4 = vector.broadcast %3 : vector<1x16xf32> to vector<8x16xf32>
    %5 = arith.addf %2, %4 : vector<8x16xf32>
    %cst_5 = arith.constant dense<0xFF800000> : vector<8xf32>
    %6 = vector.multi_reduction <maximumf>, %5, %cst_5 [1] : vector<8x16xf32> to vector<8xf32>
    %7 = vector.shape_cast %6 : vector<8xf32> to vector<8x1xf32>
    %8 = vector.broadcast %7 : vector<8x1xf32> to vector<8x16xf32>
    %9 = arith.subf %5, %8 : vector<8x16xf32>
    %10 = math.exp %9 : vector<8x16xf32>
    %cst_6 = arith.constant dense<0.000000e+00> : vector<8xf32>
    %11 = vector.multi_reduction <add>, %10, %cst_6 [1] : vector<8x16xf32> to vector<8xf32>
    %12 = vector.shape_cast %11 : vector<8xf32> to vector<8x1xf32>
    %13 = vector.broadcast %12 : vector<8x1xf32> to vector<8x16xf32>
    %14 = arith.divf %10, %13 : vector<8x16xf32>
    %c0_7 = arith.constant 0 : index
    %c0_8 = arith.constant 0 : index
    %15 = vector.load %arg4[%c0_7, %c0_8] : memref<8x16xf32, #tpu.memory_space<vmem>>, vector<8x16xf32>
    tpu.vector_store %arg4[%c0_7, %c0_8], %14 {strides = array<i32>} : memref<8x16xf32, #tpu.memory_space<vmem>>, vector<8x16xf32>,
    return
  }
  func.func @transform_0(%arg0: i32) -> (i32, i32) {
    %c0_i32 = arith.constant 0 : i32
    %c0_i32_0 = arith.constant 0 : i32
    return %arg0, %c0_i32 : i32, i32
  }
  func.func @transform_1(%arg0: i32) -> (i32, i32) {
    %c0_i32 = arith.constant 0 : i32
    %c0_i32_0 = arith.constant 0 : i32
    %c0_i32_1 = arith.constant 0 : i32
    return %c0_i32, %c0_i32_0 : i32, i32
  }
  func.func @transform_2(%arg0: i32) -> (i32, i32) {
    %c0_i32 = arith.constant 0 : i32
    %c0_i32_0 = arith.constant 0 : i32
    %c0_i32_1 = arith.constant 0 : i32
    return %c0_i32, %c0_i32_0 : i32, i32
  }
  func.func @transform_3(%arg0: i32) -> (i32, i32) {
    %c0_i32 = arith.constant 0 : i32
    %c0_i32_0 = arith.constant 0 : i32
    return %arg0, %c0_i32 : i32, i32
  }
}

</mosaic_0001>

<llo_original>
// kernel: tpu_custom_call.1
$region0: #{tpu_custom_call.1}
  #allocation0 [shape = 'u32[]', space=smem, size = 0x4, offset = 0x4, fixed_abs, tag = 'smem constant byte address 0x4 - core index']
  #allocation1 [shape = 'u32[144,128]{1,0:T(1,128)}', space=vmem, size = 0x12000, scoped, tag = 'internal scratch']
  %s0 = inlined_call_operand.vmem [shape: bf16[8,32], index: 0, kind: input, shape index: {}]
  %s1 = inlined_call_operand.vmem [shape: bf16[32,16], index: 1, kind: input, shape index: {}]
  %s2 = inlined_call_operand.vmem [shape: f32[1,16], index: 2, kind: input, shape index: {}]
  %s3 = inlined_call_operand.hbm [shape: f32[8,16], index: 3, kind: output, shape index: {}]
  %s4 = sld [smem:[#allocation0]]
  $region22: #{tpu_custom_call.1} parent=0
    _
  %s6 = ssub.s32 1, %s4
  %s7 = scalar_select 0, %s6, %s4
  $region1: #{tpu_custom_call.1} parent=0
    #allocation2 [shape = 'u8[4096]{0}', space=vmem, size = 0x1000, scoped, tag = 'output window, operand 0, single buffered']
    #allocation3 [shape = 's32[1]{0}', space=sflag, size = 0x4, scoped, tag = 'scoped memory for tpu_custom_call.1']
    %8 = vsyncpa [#allocation3], 0
    // Predicated region
    $region2: #{tpu_custom_call.1} parent=1 // pred_check
      _
    $region3: #{tpu_custom_call.1} parent=1 // pred_check_branch
      %10 = sbr.rel (0) target = $region5
    $region4: #{tpu_custom_call.1} parent=1 // pred_region
      _
    $region5: #{tpu_custom_call.1} parent=1 // pred_fallthru
      _
    // Predicated region
    $region6: #{tpu_custom_call.1} parent=1 // pred_check
      _
    $region7: #{tpu_custom_call.1} parent=1 // pred_check_branch
      %12 = sbr.rel (0) target = $region9
    $region8: #{tpu_custom_call.1} parent=1 // pred_region
      _
    $region9: #{tpu_custom_call.1} parent=1 // pred_fallthru
      _
    // Predicated region
    $region10: #{tpu_custom_call.1} parent=1 // pred_check
      _
    $region11: #{tpu_custom_call.1} parent=1 // pred_check_branch
      %14 = sbr.rel (0) target = $region13
    $region12: #{tpu_custom_call.1} parent=1 // pred_region
      _
    $region13: #{tpu_custom_call.1} parent=1 // pred_fallthru
      _
    %v16 = vld [vmem:[%s0] sm:$0xf]
    %v17 = vld [vmem:[%s1] sm:$0xf]
    %v18 = vld [vmem:[%s1 + $0x4] sm:$0xf]
    %v19 = vld [vmem:[%s1 + $0x8] sm:$0xf]
    %v20 = vld [vmem:[%s1 + $0xc] sm:$0xf]
    %v21 = vld [vmem:[%s2] sm:$0x1]
    %v23 = vlaneseq
    %v24 = vshrl.u32 %v23, 7
    %v25 = vsub.s32 0, %v24
    %v26 = vrot.slane %v21, %v25
    %v32 = vunpack.c.l.b16 %v17
    %v33 = vunpack.c.l.b16 %v18
    %v34 = vunpack.c.l.b16 %v19
    %v35 = vunpack.c.l.b16 %v20
    %v36 = vpack.c.b16 %v33, %v32
    %v37 = vpack.c.b16 %v35, %v34
    %vm40 = vcmask 261120
    %v42 = vsel %vm40, %v16, 0
    %44 = vmatprep.subr.bf16.mxu0 0
    %45 = vmatpush1.bf16.msra.mxu0 %v36
    %46 = vmatprep.subr.bf16.mxu0 0
    %47 = vmatpush1.bf16.msra.mxu0 %v37
    %48 = vmatprep.subr.bf16.mxu0 0
    %49 = vmatpush1.bf16.msra.mxu0 0
    %50 = vmatprep.subr.bf16.mxu0 0
    %51 = vmatpush1.bf16.msra.mxu0 0
    %52 = vmatprep.subr.bf16.mxu0 0
    %53 = vmatpush1.bf16.msra.mxu0 0
    %54 = vmatprep.subr.bf16.mxu0 0
    %55 = vmatpush1.bf16.msra.mxu0 0
    %56 = vmatprep.subr.bf16.mxu0 0
    %57 = vmatpush1.bf16.msra.mxu0 0
    %58 = vmatprep.subr.bf16.mxu0 0
    %59 = vmatpush1.bf16.msra.mxu0 0
    %60 = vmatprep.subr.bf16.mxu0 0
    %61 = vmatpush1.bf16.msra.mxu0 0
    %62 = vmatprep.subr.bf16.mxu0 0
    %63 = vmatpush1.bf16.msra.mxu0 0
    %64 = vmatprep.subr.bf16.mxu0 0
    %65 = vmatpush1.bf16.msra.mxu0 0
    %66 = vmatprep.subr.bf16.mxu0 0
    %67 = vmatpush1.bf16.msra.mxu0 0
    %68 = vmatprep.subr.bf16.mxu0 0
    %69 = vmatpush1.bf16.msra.mxu0 0
    %70 = vmatprep.subr.bf16.mxu0 0
    %71 = vmatpush1.bf16.msra.mxu0 0
    %72 = vmatprep.subr.bf16.mxu0 0
    %73 = vmatpush1.bf16.msra.mxu0 0
    %74 = vmatprep.subr.bf16.mxu0 0
    %75 = vmatpush1.bf16.msra.mxu0 0
    %76 = vmatprep.mubr.bf16.mxu0 0
    %77 = vmatmul.mubr.bf16.gmra.mrb[0].mxu0 %v42
    %v78 = vpop.f32.mrb[0].mxu0
    %v79 = vadd.f32 %v26, %v78
    %v80 = vpop.f32.mrb[0].mxu0
    %v81 = vpop.f32.mrb[0].mxu0
    %v82 = vpop.f32.mrb[0].mxu0
    %83 = vdwg.mxu0
    %vm84 = vcmask 130048
    %v85 = vsel %vm84, %v79, -inf
    %86 = vmax.xlane.f32.xlu0 %v85
    %v87 = vpop.xlane.xlu0 %86
    %v88 = vsub.f32 %v79, %v87
    %v89 = vmul.f32 %v88, 1.442695
    %v90 = vpow.pop %v89
    %v91 = vsel %vm84, %v90, 0.0
    %92 = vadd.xlane.f32.xlu0 %v91
    %v93 = vpop.xlane.xlu0 %92
    %v94 = vrcp.pop %v93
    %v95 = vmul.f32 %v90, %v94
    %96 = vst.msk [vmem:[#allocation2] sm:$0xff] %vm84, %v95
    // Predicated region
    $region14: #{tpu_custom_call.1} parent=1 // pred_check
      _
    $region15: #{tpu_custom_call.1} parent=1 // pred_check_branch
      %98 = sbr.rel (0) target = $region17
    $region16: #{tpu_custom_call.1} parent=1 // pred_region
      %s100 = ssub.s32 128, 128
      %101 = vsyncadd [#allocation3], %s100
      %s103 = sshll.u32 [#allocation2], 4
      %s104 = int_to_ptr.vmem [resolvable:$true] %s103
      %106 = dma.vmem_to_hbm [thread:$0]  %s104, 128, %s3, [#allocation3]
    $region17: #{tpu_custom_call.1} parent=1 // pred_fallthru
      _
    // Predicated region
    $region18: #{tpu_custom_call.1} parent=1 // pred_check
      _
    $region19: #{tpu_custom_call.1} parent=1 // pred_check_branch
      %108 = sbr.rel (0) target = $region21
    $region20: #{tpu_custom_call.1} parent=1 // pred_region
      %109 = dma.done [#allocation3], 128
    $region21: #{tpu_custom_call.1} parent=1 // pred_fallthru
      _
    %110 = vsyncpa [#allocation3], 1

</llo_original>
